<compile_context>
chip_gen: v5e
topology: v5e:2x2
jax: 0.10.0
libtpu: 0.0.40
codegen_flags: <defaults>
</compile_context>

<pallas_src>
import jax
import jax.numpy as jnp
from jax.experimental import pallas as pl
from jax.experimental.pallas import tpu as pltpu


def _downsample_conv_kernel(xs_ref, w_ref, b_ref, o_ref, pad_ref, lhs_ref):
    # xs_ref : (1, H, Wp, 2C)          NHWC input; column pairs folded into the lane dim
    # w_ref  : (9*C, C_out_pad)        conv weight, rows ordered (ki, kj, c), cols zero-padded
    # b_ref  : (1, C_out_pad)          conv bias (zero-padded)
    # o_ref  : (1, Hp, Wp, Co_store)   output block (Co_store = real C_out unless padded path)
    # pad_ref: (Hp+2, Wp+2, C)         zero-padded pooled activations (VMEM scratch)
    # lhs_ref: (tm*Wp, 9*C)            per-row-tile im2col operand (VMEM scratch)
    _, H, Wp, C2 = xs_ref.shape
    C = C2 // 2
    Hp = H // 2
    Co_store = o_ref.shape[-1]
    tm_rows = lhs_ref.shape[0] // Wp          # pooled rows per in-kernel tile

    # ---- 2x2 average pool straight from NHWC (== chunk-sum/4 of space_to_depth) ----
    xs = xs_ref[0]                                      # (H, Wp, 2C)
    xr = xs.reshape(Hp, 2, Wp, C2)                      # split row pairs (major-dim split)
    rsum = xr[:, 0, :, :] + xr[:, 1, :, :]              # (Hp, Wp, 2C)  row-pair sum
    pooled = (rsum[:, :, :C] + rsum[:, :, C:]) * 0.25   # (Hp, Wp, C)   + column-pair, /4

    # ---- conv padding=1: zero only the 1-wide border; interior overwritten every step ----
    # (kept per-step, not pl.when(pid==0), so it stays correct under "parallel" sharding)
    zrow = jnp.zeros((1, Wp + 2, C), dtype=pad_ref.dtype)
    zcol = jnp.zeros((Hp + 2, 1, C), dtype=pad_ref.dtype)
    pad_ref[0:1, :, :] = zrow
    pad_ref[Hp + 1:Hp + 2, :, :] = zrow
    pad_ref[:, 0:1, :] = zcol
    pad_ref[:, Wp + 1:Wp + 2, :] = zcol
    pad_ref[1:Hp + 1, 1:Wp + 1, :] = pooled.astype(pad_ref.dtype)

    # ---- row-tiled im2col:  (rows*Wp, 9C) @ (9C, C_out_pad)  per tile, store real channels ----
    n_tiles = -(-Hp // tm_rows)                         # static
    for t in range(n_tiles):
        r0 = t * tm_rows
        rows = min(tm_rows, Hp - r0)
        nrow = rows * Wp
        tap = 0
        for ki in range(3):
            for kj in range(3):
                # static slice-store into the lhs scratch (no concatenate temp)
                win = pad_ref[r0 + ki:r0 + ki + rows, kj:kj + Wp, :]     # (rows, Wp, C)
                lhs_ref[0:nrow, tap * C:(tap + 1) * C] = win.reshape(nrow, C)
                tap += 1
        acc = jnp.dot(lhs_ref[0:nrow, :], w_ref[...],
                      preferred_element_type=jnp.float32)
        acc = acc + b_ref[...]                          # (nrow, C_out_pad) + (1, C_out_pad)
        o_ref[0:1, r0:r0 + rows, :, :] = (
            acc[:, :Co_store].reshape(1, rows, Wp, Co_store).astype(o_ref.dtype))


def _const_spec(shape):
    """BlockSpec for an operand whose block is constant across the grid.

    Requests single buffering (no re-fetch -> no second VMEM buffer); falls back to the
    default double-buffered spec if this JAX version lacks the pipeline_mode kwarg.
    """
    zeros = (0,) * len(shape)
    index_map = lambda b: zeros
    try:
        return pl.BlockSpec(shape, index_map, pipeline_mode=pl.Buffered(1))
    except (TypeError, AttributeError):
        return pl.BlockSpec(shape, index_map)


def downsample_conv2d(x, weight, bias):
    """x: (B, C, H, W) NCHW (PyTorch convention), weight: (C_out, C, 3, 3), bias: (C_out,).
       Returns (B, C_out, H//2, W//2), matching Downsample_Conv2d.forward."""
    B, C, H, W = x.shape
    assert H % 2 == 0 and W % 2 == 0
    Hp, Wp = H // 2, W // 2
    C_out = weight.shape[0]
    C_out_pad = ((C_out + 127) // 128) * 128             # matmul N stays MXU-clean in VMEM

    # Store lane-dense padded output only when the pad factor is <= 2x (C_out >= 64 and not
    # already a multiple of 128); otherwise store only the real channels (masked vst in VMEM
    # is far cheaper than padded HBM writeback + a post-kernel slice).
    store_padded = (C_out >= 64) and (C_out % 128 != 0)
    Co_store = C_out_pad if store_padded else C_out

    # --- glue: NHWC + free reshape folding column pairs into the lane dim ---
    x_nhwc = jnp.transpose(x, (0, 2, 3, 1))              # (B, H, W, C)
    x_view = x_nhwc.reshape(B, H, Wp, 2 * C)             # same memory layout, no extra pass

    # --- glue: weight/bias re-layout to a single (9C, C_out_pad) matmul operand ---
    w_m = jnp.transpose(weight, (2, 3, 1, 0)).reshape(9 * C, C_out)   # rows ordered (ki, kj, c)
    w_m = jnp.pad(w_m, ((0, 0), (0, C_out_pad - C_out))).astype(jnp.float32)
    b_m = jnp.pad(bias, (0, C_out_pad - C_out)).reshape(1, C_out_pad).astype(jnp.float32)

    # --- in-kernel row tile: bound the im2col scratch (~4 MiB target, <= 32 unrolled tiles) ---
    per_row_bytes = Wp * 9 * C * 4
    tm = min(Hp, max(max(1, (4 * 1024 * 1024) // per_row_bytes), (Hp + 31) // 32))
    # Note: Wp % 8 == 0 keeps the (rows, Wp, C) -> (rows*Wp, C) merges free sublane relabels.

    # --- per-generation VMEM limit (leave headroom below physical capacity) ---
    try:
        phys_vmem = pltpu.get_tpu_info().vmem_capacity_bytes   # 64 MiB v7x, 128 MiB v5e/v6e
    except Exception:
        phys_vmem = 128 * 1024 * 1024
    vmem_limit = int(min(100 * 1024 * 1024, phys_vmem * 3 // 4))

    flops = 2 * B * Hp * Wp * (9 * C) * C_out            # real C_out (no pad overstatement)
    bytes_accessed = int(x.size * x.dtype.itemsize + w_m.size * 4 + b_m.size * 4
                         + B * Hp * Wp * Co_store * 4)

    out_nhwc = pl.pallas_call(
        _downsample_conv_kernel,
        out_shape=jax.ShapeDtypeStruct((B, Hp, Wp, Co_store), jnp.float32),
        grid=(B,),
        in_specs=[
            pl.BlockSpec((1, H, Wp, 2 * C), lambda b: (b, 0, 0, 0)),
            _const_spec((9 * C, C_out_pad)),
            _const_spec((1, C_out_pad)),
        ],
        out_specs=pl.BlockSpec((1, Hp, Wp, Co_store), lambda b: (b, 0, 0, 0)),
        scratch_shapes=[
            pltpu.VMEM((Hp + 2, Wp + 2, C), jnp.float32),   # padded pooled activations
            pltpu.VMEM((tm * Wp, 9 * C), jnp.float32),      # per-tile im2col operand
        ],
        compiler_params=pltpu.CompilerParams(
            dimension_semantics=("parallel",),
            vmem_limit_bytes=vmem_limit),
        cost_estimate=pl.CostEstimate(flops=flops, transcendentals=0,
                                      bytes_accessed=bytes_accessed),
    )(x_view, w_m, b_m)

    if store_padded:
        out_nhwc = out_nhwc[..., :C_out]                  # only taken when pad factor <= 2x
    return jnp.transpose(out_nhwc, (0, 3, 1, 2))          # real-sized tensor back to NCHW


if __name__ == "__main__":
    key = jax.random.PRNGKey(0)
    kx, kw, kb = jax.random.split(key, 3)

    B, C_in, H, W = 2, 4, 16, 16
    C_out = 8

    x = jax.random.normal(kx, (B, C_in, H, W), dtype=jnp.float32)
    weight = jax.random.normal(kw, (C_out, C_in, 3, 3), dtype=jnp.float32) * 0.1
    bias = jax.random.normal(kb, (C_out,), dtype=jnp.float32) * 0.1

    out = jax.jit(downsample_conv2d)(x, weight, bias)
    out = jax.block_until_ready(out)

    # pure-JAX reference: 2x2 avg-pool (== chunk-sum/4 of space_to_depth) then conv2d(pad=1)
    pooled = jnp.mean(x.reshape(B, C_in, H // 2, 2, W // 2, 2), axis=(3, 5))
    ref = jax.lax.conv_general_dilated(
        pooled, weight, window_strides=(1, 1), padding=((1, 1), (1, 1)),
        dimension_numbers=("NCHW", "OIHW", "NCHW")) + bias[None, :, None, None]

    assert out.shape == (B, C_out, H // 2, W // 2), out.shape
    assert jnp.allclose(out, ref, atol=1e-4, rtol=1e-4), float(jnp.max(jnp.abs(out - ref)))
    print("KERNEL_OK")
</pallas_src>

<mosaic_0001>
module attributes {stable_mosaic.version = 11 : i64} {
  func.func @_downsample_conv_kernel(%arg0: i32, %arg1: memref<1x16x8x8xf32, #tpu.memory_space<vmem>>, %arg2: memref<36x128xf32, #tpu.memory_space<vmem>>, %arg3: memref<1x128xf32, #tpu.memory_space<vmem>>, %arg4: memref<1x8x8x8xf32, #tpu.memory_space<vmem>>, %arg5: memref<10x10x4xf32, #tpu.memory_space<vmem>>, %arg6: memref<64x36xf32, #tpu.memory_space<vmem>>) attributes {dimension_semantics = [#tpu.dimension_semantics<parallel>], iteration_bounds = array<i64: 2>, scalar_prefetch = 0 : i64, scratch_operands = 2 : i64, tpu.core_type = #tpu.core_type<tc>, window_params = [{transform_indices = @transform_0, window_bounds = array<i64: 1, 16, 8, 8>}, {pipeline_mode = #tpu.pipeline_mode<synchronous>, transform_indices = @transform_1, window_bounds = array<i64: 36, 128>}, {pipeline_mode = #tpu.pipeline_mode<synchronous>, transform_indices = @transform_2, window_bounds = array<i64: 1, 128>}, {transform_indices = @transform_3, window_bounds = array<i64: 1, 8, 8, 8>}]} {
    %c0 = arith.constant 0 : index
    %c0_0 = arith.constant 0 : index
    %c0_1 = arith.constant 0 : index
    %c0_2 = arith.constant 0 : index
    %0 = vector.load %arg1[%c0, %c0_0, %c0_1, %c0_2] : memref<1x16x8x8xf32, #tpu.memory_space<vmem>>, vector<1x16x8x8xf32>
    %1 = vector.shape_cast %0 : vector<1x16x8x8xf32> to vector<16x8x8xf32>
    %2 = vector.shape_cast %1 : vector<16x8x8xf32> to vector<8x2x8x8xf32>
    %3 = vector.extract_strided_slice %2 {offsets = [0, 0, 0, 0], sizes = [8, 1, 8, 8], strides = [1, 1, 1, 1]} : vector<8x2x8x8xf32> to vector<8x1x8x8xf32>
    %4 = vector.shape_cast %3 : vector<8x1x8x8xf32> to vector<8x8x8xf32>
    %5 = vector.extract_strided_slice %2 {offsets = [0, 1, 0, 0], sizes = [8, 1, 8, 8], strides = [1, 1, 1, 1]} : vector<8x2x8x8xf32> to vector<8x1x8x8xf32>
    %6 = vector.shape_cast %5 : vector<8x1x8x8xf32> to vector<8x8x8xf32>
    %7 = arith.addf %4, %6 : vector<8x8x8xf32>
    %8 = vector.extract_strided_slice %7 {offsets = [0, 0, 0], sizes = [8, 8, 4], strides = [1, 1, 1]} : vector<8x8x8xf32> to vector<8x8x4xf32>
    %9 = vector.extract_strided_slice %7 {offsets = [0, 0, 4], sizes = [8, 8, 4], strides = [1, 1, 1]} : vector<8x8x8xf32> to vector<8x8x4xf32>
    %10 = arith.addf %8, %9 : vector<8x8x4xf32>
    %cst = arith.constant 2.500000e-01 : f32
    %11 = vector.broadcast %cst : f32 to vector<8x8x4xf32>
    %12 = arith.mulf %10, %11 : vector<8x8x4xf32>
    %cst_3 = arith.constant 0.000000e+00 : f32
    %13 = vector.broadcast %cst_3 : f32 to vector<1x10x4xf32>
    %cst_4 = arith.constant 0.000000e+00 : f32
    %14 = vector.broadcast %cst_4 : f32 to vector<10x1x4xf32>
    %c0_5 = arith.constant 0 : index
    %c0_6 = arith.constant 0 : index
    %c0_7 = arith.constant 0 : index
    %15 = vector.load %arg5[%c0_5, %c0_6, %c0_7] : memref<10x10x4xf32, #tpu.memory_space<vmem>>, vector<1x10x4xf32>
    tpu.vector_store %arg5[%c0_5, %c0_6, %c0_7], %13 {strides = array<i32>} : memref<10x10x4xf32, #tpu.memory_space<vmem>>, vector<1x10x4xf32>,
    %c9 = arith.constant 9 : index
    %c0_8 = arith.constant 0 : index
    %c0_9 = arith.constant 0 : index
    %16 = vector.load %arg5[%c9, %c0_8, %c0_9] : memref<10x10x4xf32, #tpu.memory_space<vmem>>, vector<1x10x4xf32>
    tpu.vector_store %arg5[%c9, %c0_8, %c0_9], %13 {strides = array<i32>} : memref<10x10x4xf32, #tpu.memory_space<vmem>>, vector<1x10x4xf32>,
    %c0_10 = arith.constant 0 : index
    %c0_11 = arith.constant 0 : index
    %c0_12 = arith.constant 0 : index
    %17 = vector.load %arg5[%c0_10, %c0_11, %c0_12] : memref<10x10x4xf32, #tpu.memory_space<vmem>>, vector<10x1x4xf32>
    tpu.vector_store %arg5[%c0_10, %c0_11, %c0_12], %14 {strides = array<i32>} : memref<10x10x4xf32, #tpu.memory_space<vmem>>, vector<10x1x4xf32>,
    %c0_13 = arith.constant 0 : index
    %c9_14 = arith.constant 9 : index
    %c0_15 = arith.constant 0 : index
    %18 = vector.load %arg5[%c0_13, %c9_14, %c0_15] : memref<10x10x4xf32, #tpu.memory_space<vmem>>, vector<10x1x4xf32>
    tpu.vector_store %arg5[%c0_13, %c9_14, %c0_15], %14 {strides = array<i32>} : memref<10x10x4xf32, #tpu.memory_space<vmem>>, vector<10x1x4xf32>,
    %c1 = arith.constant 1 : index
    %c1_16 = arith.constant 1 : index
    %c0_17 = arith.constant 0 : index
    %19 = vector.load %arg5[%c1, %c1_16, %c0_17] : memref<10x10x4xf32, #tpu.memory_space<vmem>>, vector<8x8x4xf32>
    tpu.vector_store %arg5[%c1, %c1_16, %c0_17], %12 {strides = array<i32>} : memref<10x10x4xf32, #tpu.memory_space<vmem>>, vector<8x8x4xf32>,
    %c0_18 = arith.constant 0 : index
    %c0_19 = arith.constant 0 : index
    %c0_20 = arith.constant 0 : index
    %20 = vector.load %arg5[%c0_18, %c0_19, %c0_20] : memref<10x10x4xf32, #tpu.memory_space<vmem>>, vector<8x8x4xf32>
    %21 = vector.shape_cast %20 : vector<8x8x4xf32> to vector<64x4xf32>
    %c0_21 = arith.constant 0 : index
    %c0_22 = arith.constant 0 : index
    %22 = vector.load %arg6[%c0_21, %c0_22] : memref<64x36xf32, #tpu.memory_space<vmem>>, vector<64x4xf32>
    tpu.vector_store %arg6[%c0_21, %c0_22], %21 {strides = array<i32>} : memref<64x36xf32, #tpu.memory_space<vmem>>, vector<64x4xf32>,
    %c0_23 = arith.constant 0 : index
    %c1_24 = arith.constant 1 : index
    %c0_25 = arith.constant 0 : index
    %23 = vector.load %arg5[%c0_23, %c1_24, %c0_25] : memref<10x10x4xf32, #tpu.memory_space<vmem>>, vector<8x8x4xf32>
    %24 = vector.shape_cast %23 : vector<8x8x4xf32> to vector<64x4xf32>
    %c0_26 = arith.constant 0 : index
    %c4 = arith.constant 4 : index
    %25 = vector.load %arg6[%c0_26, %c4] : memref<64x36xf32, #tpu.memory_space<vmem>>, vector<64x4xf32>
    tpu.vector_store %arg6[%c0_26, %c4], %24 {strides = array<i32>} : memref<64x36xf32, #tpu.memory_space<vmem>>, vector<64x4xf32>,
    %c0_27 = arith.constant 0 : index
    %c2 = arith.constant 2 : index
    %c0_28 = arith.constant 0 : index
    %26 = vector.load %arg5[%c0_27, %c2, %c0_28] : memref<10x10x4xf32, #tpu.memory_space<vmem>>, vector<8x8x4xf32>
    %27 = vector.shape_cast %26 : vector<8x8x4xf32> to vector<64x4xf32>
    %c0_29 = arith.constant 0 : index
    %c8 = arith.constant 8 : index
    %28 = vector.load %arg6[%c0_29, %c8] : memref<64x36xf32, #tpu.memory_space<vmem>>, vector<64x4xf32>
    tpu.vector_store %arg6[%c0_29, %c8], %27 {strides = array<i32>} : memref<64x36xf32, #tpu.memory_space<vmem>>, vector<64x4xf32>,
    %c1_30 = arith.constant 1 : index
    %c0_31 = arith.constant 0 : index
    %c0_32 = arith.constant 0 : index
    %29 = vector.load %arg5[%c1_30, %c0_31, %c0_32] : memref<10x10x4xf32, #tpu.memory_space<vmem>>, vector<8x8x4xf32>
    %30 = vector.shape_cast %29 : vector<8x8x4xf32> to vector<64x4xf32>
    %c0_33 = arith.constant 0 : index
    %c12 = arith.constant 12 : index
    %31 = vector.load %arg6[%c0_33, %c12] : memref<64x36xf32, #tpu.memory_space<vmem>>, vector<64x4xf32>
    tpu.vector_store %arg6[%c0_33, %c12], %30 {strides = array<i32>} : memref<64x36xf32, #tpu.memory_space<vmem>>, vector<64x4xf32>,
    %c1_34 = arith.constant 1 : index
    %c1_35 = arith.constant 1 : index
    %c0_36 = arith.constant 0 : index
    %32 = vector.load %arg5[%c1_34, %c1_35, %c0_36] : memref<10x10x4xf32, #tpu.memory_space<vmem>>, vector<8x8x4xf32>
    %33 = vector.shape_cast %32 : vector<8x8x4xf32> to vector<64x4xf32>
    %c0_37 = arith.constant 0 : index
    %c16 = arith.constant 16 : index
    %34 = vector.load %arg6[%c0_37, %c16] : memref<64x36xf32, #tpu.memory_space<vmem>>, vector<64x4xf32>
    tpu.vector_store %arg6[%c0_37, %c16], %33 {strides = array<i32>} : memref<64x36xf32, #tpu.memory_space<vmem>>, vector<64x4xf32>,
    %c1_38 = arith.constant 1 : index
    %c2_39 = arith.constant 2 : index
    %c0_40 = arith.constant 0 : index
    %35 = vector.load %arg5[%c1_38, %c2_39, %c0_40] : memref<10x10x4xf32, #tpu.memory_space<vmem>>, vector<8x8x4xf32>
    %36 = vector.shape_cast %35 : vector<8x8x4xf32> to vector<64x4xf32>
    %c0_41 = arith.constant 0 : index
    %c20 = arith.constant 20 : index
    %37 = vector.load %arg6[%c0_41, %c20] : memref<64x36xf32, #tpu.memory_space<vmem>>, vector<64x4xf32>
    tpu.vector_store %arg6[%c0_41, %c20], %36 {strides = array<i32>} : memref<64x36xf32, #tpu.memory_space<vmem>>, vector<64x4xf32>,
    %c2_42 = arith.constant 2 : index
    %c0_43 = arith.constant 0 : index
    %c0_44 = arith.constant 0 : index
    %38 = vector.load %arg5[%c2_42, %c0_43, %c0_44] : memref<10x10x4xf32, #tpu.memory_space<vmem>>, vector<8x8x4xf32>
    %39 = vector.shape_cast %38 : vector<8x8x4xf32> to vector<64x4xf32>
    %c0_45 = arith.constant 0 : index
    %c24 = arith.constant 24 : index
    %40 = vector.load %arg6[%c0_45, %c24] : memref<64x36xf32, #tpu.memory_space<vmem>>, vector<64x4xf32>
    tpu.vector_store %arg6[%c0_45, %c24], %39 {strides = array<i32>} : memref<64x36xf32, #tpu.memory_space<vmem>>, vector<64x4xf32>,
    %c2_46 = arith.constant 2 : index
    %c1_47 = arith.constant 1 : index
    %c0_48 = arith.constant 0 : index
    %41 = vector.load %arg5[%c2_46, %c1_47, %c0_48] : memref<10x10x4xf32, #tpu.memory_space<vmem>>, vector<8x8x4xf32>
    %42 = vector.shape_cast %41 : vector<8x8x4xf32> to vector<64x4xf32>
    %c0_49 = arith.constant 0 : index
    %c28 = arith.constant 28 : index
    %43 = vector.load %arg6[%c0_49, %c28] : memref<64x36xf32, #tpu.memory_space<vmem>>, vector<64x4xf32>
    tpu.vector_store %arg6[%c0_49, %c28], %42 {strides = array<i32>} : memref<64x36xf32, #tpu.memory_space<vmem>>, vector<64x4xf32>,
    %c2_50 = arith.constant 2 : index
    %c2_51 = arith.constant 2 : index
    %c0_52 = arith.constant 0 : index
    %44 = vector.load %arg5[%c2_50, %c2_51, %c0_52] : memref<10x10x4xf32, #tpu.memory_space<vmem>>, vector<8x8x4xf32>
    %45 = vector.shape_cast %44 : vector<8x8x4xf32> to vector<64x4xf32>
    %c0_53 = arith.constant 0 : index
    %c32 = arith.constant 32 : index
    %46 = vector.load %arg6[%c0_53, %c32] : memref<64x36xf32, #tpu.memory_space<vmem>>, vector<64x4xf32>
    tpu.vector_store %arg6[%c0_53, %c32], %45 {strides = array<i32>} : memref<64x36xf32, #tpu.memory_space<vmem>>, vector<64x4xf32>,
    %c0_54 = arith.constant 0 : index
    %c0_55 = arith.constant 0 : index
    %47 = vector.load %arg6[%c0_54, %c0_55] : memref<64x36xf32, #tpu.memory_space<vmem>>, vector<64x36xf32>
    %c0_56 = arith.constant 0 : index
    %c0_57 = arith.constant 0 : index
    %48 = vector.load %arg2[%c0_56, %c0_57] : memref<36x128xf32, #tpu.memory_space<vmem>>, vector<36x128xf32>
    %cst_58 = arith.constant dense<0.000000e+00> : vector<64x128xf32>
    %49 = tpu.matmul %47, %48, %cst_58 {dimension_numbers = #tpu.dot_dimension_numbers<[1], [0], [0], [1], [0, 0, 1, 1], [], []>} : vector<64x36xf32>, vector<36x128xf32>, vector<64x128xf32> -> vector<64x128xf32>
    %c0_59 = arith.constant 0 : index
    %c0_60 = arith.constant 0 : index
    %50 = vector.load %arg3[%c0_59, %c0_60] : memref<1x128xf32, #tpu.memory_space<vmem>>, vector<1x128xf32>
    %51 = vector.broadcast %50 : vector<1x128xf32> to vector<64x128xf32>
    %52 = arith.addf %49, %51 : vector<64x128xf32>
    %53 = vector.extract_strided_slice %52 {offsets = [0, 0], sizes = [64, 8], strides = [1, 1]} : vector<64x128xf32> to vector<64x8xf32>
    %54 = vector.shape_cast %53 : vector<64x8xf32> to vector<1x8x8x8xf32>
    %c0_61 = arith.constant 0 : index
    %c0_62 = arith.constant 0 : index
    %c0_63 = arith.constant 0 : index
    %c0_64 = arith.constant 0 : index
    %55 = vector.load %arg4[%c0_61, %c0_62, %c0_63, %c0_64] : memref<1x8x8x8xf32, #tpu.memory_space<vmem>>, vector<1x8x8x8xf32>
    tpu.vector_store %arg4[%c0_61, %c0_62, %c0_63, %c0_64], %54 {strides = array<i32>} : memref<1x8x8x8xf32, #tpu.memory_space<vmem>>, vector<1x8x8x8xf32>,
    return
  }
  func.func @transform_0(%arg0: i32) -> (i32, i32, i32, i32) {
    %c0_i32 = arith.constant 0 : i32
    %c0_i32_0 = arith.constant 0 : i32
    %c0_i32_1 = arith.constant 0 : i32
    %c0_i32_2 = arith.constant 0 : i32
    return %arg0, %c0_i32, %c0_i32_0, %c0_i32_1 : i32, i32, i32, i32
  }
  func.func @transform_1(%arg0: i32) -> (i32, i32) {
    %c0_i32 = arith.constant 0 : i32
    %c0_i32_0 = arith.constant 0 : i32
    %c0_i32_1 = arith.constant 0 : i32
    return %c0_i32, %c0_i32_0 : i32, i32
  }
  func.func @transform_2(%arg0: i32) -> (i32, i32) {
    %c0_i32 = arith.constant 0 : i32
    %c0_i32_0 = arith.constant 0 : i32
    %c0_i32_1 = arith.constant 0 : i32
    return %c0_i32, %c0_i32_0 : i32, i32
  }
  func.func @transform_3(%arg0: i32) -> (i32, i32, i32, i32) {
    %c0_i32 = arith.constant 0 : i32
    %c0_i32_0 = arith.constant 0 : i32
    %c0_i32_1 = arith.constant 0 : i32
    %c0_i32_2 = arith.constant 0 : i32
    return %arg0, %c0_i32, %c0_i32_0, %c0_i32_1 : i32, i32, i32, i32
  }
}

</mosaic_0001>

<llo_original>
// kernel: downsample_conv2d.1
$region0: #{downsample_conv2d.1}
  #allocation0 [shape = 'u32[]', space=smem, size = 0x4, offset = 0x4, fixed_abs, tag = 'smem constant byte address 0x4 - core index']
  #allocation1 [shape = 'u32[72,128]{1,0:T(1,128)}', space=vmem, size = 0x9000, scoped, tag = 'internal scratch']
  #allocation2 [shape = 'f32[10,10,4]{2,1,0:T(8,128)}', space=vmem, size = 0x14000, scoped, tag = 'scratch operand']
  #allocation3 [shape = 'f32[64,36]{1,0:T(8,128)}', space=vmem, size = 0x8000, scoped, tag = 'scratch operand']
  %s0 = inlined_call_operand.vmem [shape: f32[2,16,8,8], index: 0, kind: input, shape index: {}]
  %s1 = inlined_call_operand.vmem [shape: f32[36,128], index: 1, kind: input, shape index: {}]
  %s2 = inlined_call_operand.vmem [shape: f32[1,128], index: 2, kind: input, shape index: {}]
  %s3 = inlined_call_operand.vmem [shape: f32[2,8,8,8], index: 3, kind: output, shape index: {}]
  %s4 = sld [smem:[#allocation0]]
  $region45: #{downsample_conv2d.1} parent=0
    _
  %s6 = ssub.s32 1, %s4
  %s7 = scalar_select 0, %s6, %s4
  loop: start=0, step=1, limit=4
  $region2: #{downsample_conv2d.1} parent=0 // loop_pre_header
    _
  $region3: #{downsample_conv2d.1} parent=0 // loop_header
    %s9 = sphi 0, %s13
    %p10 = scmp.ge.s32.totalorder %s9, 4
    %s19 = sphi 0, %s21
    %s22 = sphi 0, %s19
    %s23 = sphi 0, %s22
    %s39 = sphi 0, %s23
    %s43 = sphi 0, %s43
    %s45 = sphi 0, %s43
    %s46 = sphi 0, %s45
    %s60 = sphi 0, %s46
    %s64 = sphi 0, %s64
    %s66 = sphi 0, %s64
    %s67 = sphi 0, %s66
    %s81 = sphi 0, %s67
    %s87 = sphi 0, %s89
    %s90 = sphi 0, %s87
    %s91 = sphi 0, %s90
    %s107 = sphi 0, %s91
  $region4: #{downsample_conv2d.1} parent=0 // loop_header_branch
    %12 = sbr.rel (%p10) target = $region8
  $region5: #{downsample_conv2d.1} parent=0 // loop_body
    %s14 = ssub.s32 %s9, 1
    %s15 = ssub.s32 %s9, 2
    %s16 = sadd.s32 %s9, 1
    %s17 = ssub.s32 %s9, %s16
    %p18 = scmp.eq.s32.totalorder %s17, 0
    %s20 = sadd.s32 %s19, 1
    %s21 = scalar_select %p18, %s19, %s20
    %p24 = pneg %p18
    %p25 = scmp.eq.s32.totalorder %s9, 1
    %p26 = por %p24, %p25
    %p27 = scmp.ne.s32.totalorder %s19, %s22
    %p28 = scmp.eq.s32.totalorder %s9, 0
    %p29 = por %p27, %p28
    %p30 = scmp.ne.s32.totalorder %s19, %s22
    %p31 = scmp.eq.s32.totalorder %s14, 1
    %p32 = por %p30, %p31
    %p33 = scmp.ne.s32.totalorder %s22, %s23
    %p34 = scmp.eq.s32.totalorder %s14, 0
    %p35 = por %p33, %p34
    %p36 = scmp.ne.s32.totalorder %s22, %s23
    %p37 = scmp.eq.s32.totalorder %s15, 1
    %p38 = por %p36, %p37
    %p40 = scmp.ne.s32.totalorder %s23, %s39
    %p41 = scmp.eq.s32.totalorder %s15, 0
    %p42 = por %p40, %p41
    %s44 = sadd.s32 %s43, 1
    %p47 = scmp.eq.s32.totalorder %s9, 1
    %p48 = scmp.ne.s32.totalorder %s43, %s45
    %p49 = scmp.eq.s32.totalorder %s9, 0
    %p50 = por %p48, %p49
    %p51 = scmp.ne.s32.totalorder %s43, %s45
    %p52 = scmp.eq.s32.totalorder %s14, 1
    %p53 = por %p51, %p52
    %p54 = scmp.ne.s32.totalorder %s45, %s46
    %p55 = scmp.eq.s32.totalorder %s14, 0
    %p56 = por %p54, %p55
    %p57 = scmp.ne.s32.totalorder %s45, %s46
    %p58 = scmp.eq.s32.totalorder %s15, 1
    %p59 = por %p57, %p58
    %p61 = scmp.ne.s32.totalorder %s46, %s60
    %p62 = scmp.eq.s32.totalorder %s15, 0
    %p63 = por %p61, %p62
    %s65 = sadd.s32 %s64, 1
    %p68 = scmp.eq.s32.totalorder %s9, 1
    %p69 = scmp.ne.s32.totalorder %s64, %s66
    %p70 = scmp.eq.s32.totalorder %s9, 0
    %p71 = por %p69, %p70
    %p72 = scmp.ne.s32.totalorder %s64, %s66
    %p73 = scmp.eq.s32.totalorder %s14, 1
    %p74 = por %p72, %p73
    %p75 = scmp.ne.s32.totalorder %s66, %s67
    %p76 = scmp.eq.s32.totalorder %s14, 0
    %p77 = por %p75, %p76
    %p78 = scmp.ne.s32.totalorder %s66, %s67
    %p79 = scmp.eq.s32.totalorder %s15, 1
    %p80 = por %p78, %p79
    %p82 = scmp.ne.s32.totalorder %s67, %s81
    %p83 = scmp.eq.s32.totalorder %s15, 0
    %p84 = por %p82, %p83
    %s85 = ssub.s32 %s9, %s16
    %p86 = scmp.eq.s32.totalorder %s85, 0
    %s88 = sadd.s32 %s87, 1
    %s89 = scalar_select %p86, %s87, %s88
    %p92 = pneg %p86
    %p93 = scmp.eq.s32.totalorder %s9, 1
    %p94 = por %p92, %p93
    %p95 = scmp.ne.s32.totalorder %s87, %s90
    %p96 = scmp.eq.s32.totalorder %s9, 0
    %p97 = por %p95, %p96
    %p98 = scmp.ne.s32.totalorder %s87, %s90
    %p99 = scmp.eq.s32.totalorder %s14, 1
    %p100 = por %p98, %p99
    %p101 = scmp.ne.s32.totalorder %s90, %s91
    %p102 = scmp.eq.s32.totalorder %s14, 0
    %p103 = por %p101, %p102
    %p104 = scmp.ne.s32.totalorder %s90, %s91
    %p105 = scmp.eq.s32.totalorder %s15, 1
    %p106 = por %p104, %p105
    %p108 = scmp.ne.s32.totalorder %s91, %s107
    %p109 = scmp.eq.s32.totalorder %s15, 0
    %p110 = por %p108, %p109
    %p111 = scmp.le.s32.totalorder 1, %s9
    %p112 = scmp.lt.s32.totalorder %s9, 3
    %p113 = pnand %p111, %p112
    %p114 = pneg %p113
    // Predicated region
    $region9: #{downsample_conv2d.1} parent=5 // pred_check
      _
    $region10: #{downsample_conv2d.1} parent=5 // pred_check_branch
      %116 = sbr.rel (%p113) target = $region12
    $region11: #{downsample_conv2d.1} parent=5 // pred_region
      %s117 = ssub.s32 %s9, 1
      // Predicated region
      $region13: #{downsample_conv2d.1} parent=11 // pred_check
        %p118 = pneg %p56
      $region14: #{downsample_conv2d.1} parent=11 // pred_check_branch
        %120 = sbr.rel (%p118) target = $region16
      $region15: #{downsample_conv2d.1} parent=11 // pred_region
        _
      $region16: #{downsample_conv2d.1} parent=11 // pred_fallthru
        _
      // Predicated region
      $region17: #{downsample_conv2d.1} parent=11 // pred_check
        %p121 = pneg %p77
      $region18: #{downsample_conv2d.1} parent=11 // pred_check_branch
        %123 = sbr.rel (%p121) target = $region20
      $region19: #{downsample_conv2d.1} parent=11 // pred_region
        _
      $region20: #{downsample_conv2d.1} parent=11 // pred_fallthru
        _
    $region12: #{downsample_conv2d.1} parent=5 // pred_fallthru
      _
    %p124 = scmp.lt.s32.totalorder %s9, 2
    // Predicated region
    $region21: #{downsample_conv2d.1} parent=5 // pred_check
      %p125 = pneg %p124
    $region22: #{downsample_conv2d.1} parent=5 // pred_check_branch
      %127 = sbr.rel (%p125) target = $region24
    $region23: #{downsample_conv2d.1} parent=5 // pred_region
      // Predicated region
      $region25: #{downsample_conv2d.1} parent=23 // pred_check
        %p128 = pneg %p29
      $region26: #{downsample_conv2d.1} parent=23 // pred_check_branch
        %130 = sbr.rel (%p128) target = $region28
      $region27: #{downsample_conv2d.1} parent=23 // pred_region
        %p131 = scmp.lt.s32.totalorder %s9, 1
        %s132 = scalar_select %p131, %s9, 1
        %s133 = smul.addr %s132, 16
        %s134 = smul.addr %s133, 8
        %s135 = scalar_lea.vmem %s0, %s134
      $region28: #{downsample_conv2d.1} parent=23 // pred_fallthru
        _
    $region24: #{downsample_conv2d.1} parent=5 // pred_fallthru
      _
    %p136 = scmp.le.s32.totalorder 1, %s9
    %p137 = scmp.lt.s32.totalorder %s9, 3
    %p138 = pnand %p136, %p137
    %p139 = pneg %p138
    // Predicated region
    $region29: #{downsample_conv2d.1} parent=5 // pred_check
      _
    $region30: #{downsample_conv2d.1} parent=5 // pred_check_branch
      %141 = sbr.rel (%p138) target = $region32
    $region31: #{downsample_conv2d.1} parent=5 // pred_region
      %s142 = ssub.s32 %s9, 1
      %p143 = scmp.lt.s32.totalorder %s14, 1
      %s144 = scalar_select %p143, %s14, 1
      %s145 = smul.addr %s144, 16
      %s146 = smul.addr %s145, 8
      %s147 = scalar_lea.vmem %s0, %s146
      %p148 = pneg %p35
      %p149 = pneg %p32
      %p150 = pneg %p56
      %p151 = pneg %p53
      %p152 = pneg %p77
      %p153 = pneg %p74
      %p154 = pneg %p103
      %p155 = pneg %p100
      %p156 = scmp.lt.s32.totalorder %s14, 1
      %s157 = scalar_select %p156, %s14, 1
      %s158 = smul.addr %s157, 8
      %s159 = smul.addr %s158, 8
      %s160 = scalar_lea.vmem %s3, %s159
      %p161 = scmp.lt.s32.totalorder %s14, 1
      %s162 = scalar_select %p161, %s14, 1
      %s163 = smul.addr %s162, 16
      %s164 = smul.addr %s163, 8
      %s165 = scalar_lea.vmem %s0, %s164
      %p166 = scmp.lt.s32.totalorder %s14, 1
      %s167 = scalar_select %p166, %s14, 1
      %s168 = smul.addr %s167, 8
      %s169 = smul.addr %s168, 8
      %s170 = scalar_lea.vmem %s3, %s169
      %v171 = vld [vmem:[%s165] sm:$0xff]
      %v172 = vld [vmem:[%s165 + $0x8] sm:$0xff]
      %v173 = vld [vmem:[%s165 + $0x10] sm:$0xff]
      %v174 = vld [vmem:[%s165 + $0x18] sm:$0xff]
      %v175 = vld [vmem:[%s165 + $0x20] sm:$0xff]
      %v176 = vld [vmem:[%s165 + $0x28] sm:$0xff]
      %v177 = vld [vmem:[%s165 + $0x30] sm:$0xff]
      %v178 = vld [vmem:[%s165 + $0x38] sm:$0xff]
      %v179 = vld [vmem:[%s165 + $0x40] sm:$0xff]
      %v180 = vld [vmem:[%s165 + $0x48] sm:$0xff]
      %v181 = vld [vmem:[%s165 + $0x50] sm:$0xff]
      %v182 = vld [vmem:[%s165 + $0x58] sm:$0xff]
      %v183 = vld [vmem:[%s165 + $0x60] sm:$0xff]
      %v184 = vld [vmem:[%s165 + $0x68] sm:$0xff]
      %v185 = vld [vmem:[%s165 + $0x70] sm:$0xff]
      %v186 = vld [vmem:[%s165 + $0x78] sm:$0xff]
      %v187 = vadd.f32 %v171, %v172
      %v188 = vadd.f32 %v173, %v174
      %v189 = vadd.f32 %v175, %v176
      %v190 = vadd.f32 %v177, %v178
      %v191 = vadd.f32 %v179, %v180
      %v192 = vadd.f32 %v181, %v182
      %v193 = vadd.f32 %v183, %v184
      %v194 = vadd.f32 %v185, %v186
      %203 = vrot.lane.b32.xlu0 %v187, 124
      %v204 = vpop.permute.xlu0 %203
      %205 = vrot.lane.b32.xlu0 %v188, 124
      %v206 = vpop.permute.xlu0 %205
      %207 = vrot.lane.b32.xlu0 %v189, 124
      %v208 = vpop.permute.xlu0 %207
      %209 = vrot.lane.b32.xlu0 %v190, 124
      %v210 = vpop.permute.xlu0 %209
      %211 = vrot.lane.b32.xlu0 %v191, 124
      %v212 = vpop.permute.xlu0 %211
      %213 = vrot.lane.b32.xlu0 %v192, 124
      %v214 = vpop.permute.xlu0 %213
      %215 = vrot.lane.b32.xlu0 %v193, 124
      %v216 = vpop.permute.xlu0 %215
      %217 = vrot.lane.b32.xlu0 %v194, 124
      %v218 = vpop.permute.xlu0 %217
      %v227 = vadd.f32 %v187, %v204
      %v228 = vadd.f32 %v188, %v206
      %v229 = vadd.f32 %v189, %v208
      %v230 = vadd.f32 %v190, %v210
      %v231 = vadd.f32 %v191, %v212
      %v232 = vadd.f32 %v192, %v214
      %v233 = vadd.f32 %v193, %v216
      %v234 = vadd.f32 %v194, %v218
      %v235 = vmul.f32 %v227, 0.25
      %v236 = vmul.f32 %v228, 0.25
      %v237 = vmul.f32 %v229, 0.25
      %v238 = vmul.f32 %v230, 0.25
      %v239 = vmul.f32 %v231, 0.25
      %v240 = vmul.f32 %v232, 0.25
      %v241 = vmul.f32 %v233, 0.25
      %v242 = vmul.f32 %v234, 0.25
      %vm243 = vcmask 31744
      %244 = vst.msk [vmem:[#allocation2] sm:$0xff] %vm243, 0.0
      %vm245 = vcmask 25600
      %246 = vst.msk [vmem:[#allocation2 + $0x8] sm:$0x3] %vm245, 0.0
      %s247 = scalar_lea.vmem [#allocation2], 144
      %248 = vst.msk [vmem:[%s247] sm:$0xff] %vm243, 0.0
      %249 = vst.msk [vmem:[%s247 + $0x8] sm:$0x3] %vm245, 0.0
      %vm250 = vcmask 24576
      %251 = vst.msk [vmem:[#allocation2] sm:$0x1] %vm250, 0.0
      %252 = vst.msk [vmem:[#allocation2 + $0x10] sm:$0x1] %vm250, 0.0
      %253 = vst.msk [vmem:[#allocation2 + $0x20] sm:$0x1] %vm250, 0.0
      %254 = vst.msk [vmem:[#allocation2 + $0x30] sm:$0x1] %vm250, 0.0
      %255 = vst.msk [vmem:[#allocation2 + $0x40] sm:$0x1] %vm250, 0.0
      %256 = vst.msk [vmem:[#allocation2 + $0x50] sm:$0x1] %vm250, 0.0
      %257 = vst.msk [vmem:[#allocation2 + $0x60] sm:$0x1] %vm250, 0.0
      %258 = vst.msk [vmem:[#allocation2 + $0x70] sm:$0x1] %vm250, 0.0
      %259 = vst.msk [vmem:[#allocation2 + $0x80] sm:$0x1] %vm250, 0.0
      %260 = vst.msk [vmem:[#allocation2 + $0x90] sm:$0x1] %vm250, 0.0
      %261 = vst.msk [vmem:[#allocation2 + $0x9] sm:$0x1] %vm250, 0.0
      %262 = vst.msk [vmem:[#allocation2 + $0x19] sm:$0x1] %vm250, 0.0
      %263 = vst.msk [vmem:[#allocation2 + $0x29] sm:$0x1] %vm250, 0.0
      %264 = vst.msk [vmem:[#allocation2 + $0x39] sm:$0x1] %vm250, 0.0
      %265 = vst.msk [vmem:[#allocation2 + $0x49] sm:$0x1] %vm250, 0.0
      %266 = vst.msk [vmem:[#allocation2 + $0x59] sm:$0x1] %vm250, 0.0
      %267 = vst.msk [vmem:[#allocation2 + $0x69] sm:$0x1] %vm250, 0.0
      %268 = vst.msk [vmem:[#allocation2 + $0x79] sm:$0x1] %vm250, 0.0
      %269 = vst.msk [vmem:[#allocation2 + $0x89] sm:$0x1] %vm250, 0.0
      %270 = vst.msk [vmem:[#allocation2 + $0x99] sm:$0x1] %vm250, 0.0
      %s271 = scalar_lea.vmem [#allocation2], 16
      %272 = vst.msk [vmem:[%s271 + $0x1] sm:$0xff] %vm243, %v235
      %273 = vst.msk [vmem:[%s271 + $0x11] sm:$0xff] %vm243, %v236
      %274 = vst.msk [vmem:[%s271 + $0x21] sm:$0xff] %vm243, %v237
      %275 = vst.msk [vmem:[%s271 + $0x31] sm:$0xff] %vm243, %v238
      %276 = vst.msk [vmem:[%s271 + $0x41] sm:$0xff] %vm243, %v239
      %277 = vst.msk [vmem:[%s271 + $0x51] sm:$0xff] %vm243, %v240
      %278 = vst.msk [vmem:[%s271 + $0x61] sm:$0xff] %vm243, %v241
      %279 = vst.msk [vmem:[%s271 + $0x71] sm:$0xff] %vm243, %v242
      %v280 = vld [vmem:[#allocation2] sm:$0xff]
      %v281 = vld [vmem:[#allocation2 + $0x10] sm:$0xff]
      %v282 = vld [vmem:[#allocation2 + $0x20] sm:$0xff]
      %v283 = vld [vmem:[#allocation2 + $0x30] sm:$0xff]
      %v284 = vld [vmem:[#allocation2 + $0x40] sm:$0xff]
      %v285 = vld [vmem:[#allocation2 + $0x50] sm:$0xff]
      %v286 = vld [vmem:[#allocation2 + $0x60] sm:$0xff]
      %v287 = vld [vmem:[#allocation2 + $0x70] sm:$0xff]
      %288 = vst.msk [vmem:[#allocation3] sm:$0xff] %vm243, %v280
      %289 = vst.msk [vmem:[#allocation3 + $0x8] sm:$0xff] %vm243, %v281
      %290 = vst.msk [vmem:[#allocation3 + $0x10] sm:$0xff] %vm243, %v282
      %291 = vst.msk [vmem:[#allocation3 + $0x18] sm:$0xff] %vm243, %v283
      %292 = vst.msk [vmem:[#allocation3 + $0x20] sm:$0xff] %vm243, %v284
      %293 = vst.msk [vmem:[#allocation3 + $0x28] sm:$0xff] %vm243, %v285
      %294 = vst.msk [vmem:[#allocation3 + $0x30] sm:$0xff] %vm243, %v286
      %295 = vst.msk [vmem:[#allocation3 + $0x38] sm:$0xff] %vm243, %v287
      %v296 = vld [vmem:[#allocation2 + $0x1] sm:$0xff]
      %v297 = vld [vmem:[#allocation2 + $0x11] sm:$0xff]
      %v298 = vld [vmem:[#allocation2 + $0x21] sm:$0xff]
      %v299 = vld [vmem:[#allocation2 + $0x31] sm:$0xff]
      %v300 = vld [vmem:[#allocation2 + $0x41] sm:$0xff]
      %v301 = vld [vmem:[#allocation2 + $0x51] sm:$0xff]
      %v302 = vld [vmem:[#allocation2 + $0x61] sm:$0xff]
      %v303 = vld [vmem:[#allocation2 + $0x71] sm:$0xff]
      %312 = vrot.lane.b32.xlu0 %v296, 4
      %v313 = vpop.permute.xlu0 %312
      %314 = vrot.lane.b32.xlu0 %v297, 4
      %v315 = vpop.permute.xlu0 %314
      %316 = vrot.lane.b32.xlu0 %v298, 4
      %v317 = vpop.permute.xlu0 %316
      %318 = vrot.lane.b32.xlu0 %v299, 4
      %v319 = vpop.permute.xlu0 %318
      %320 = vrot.lane.b32.xlu0 %v300, 4
      %v321 = vpop.permute.xlu0 %320
      %322 = vrot.lane.b32.xlu0 %v301, 4
      %v323 = vpop.permute.xlu0 %322
      %324 = vrot.lane.b32.xlu0 %v302, 4
      %v325 = vpop.permute.xlu0 %324
      %326 = vrot.lane.b32.xlu0 %v303, 4
      %v327 = vpop.permute.xlu0 %326
      %vm336 = vcmask 64544
      %337 = vst.msk [vmem:[#allocation3] sm:$0xff] %vm336, %v313
      %338 = vst.msk [vmem:[#allocation3 + $0x8] sm:$0xff] %vm336, %v315
      %339 = vst.msk [vmem:[#allocation3 + $0x10] sm:$0xff] %vm336, %v317
      %340 = vst.msk [vmem:[#allocation3 + $0x18] sm:$0xff] %vm336, %v319
      %341 = vst.msk [vmem:[#allocation3 + $0x20] sm:$0xff] %vm336, %v321
      %342 = vst.msk [vmem:[#allocation3 + $0x28] sm:$0xff] %vm336, %v323
      %343 = vst.msk [vmem:[#allocation3 + $0x30] sm:$0xff] %vm336, %v325
      %344 = vst.msk [vmem:[#allocation3 + $0x38] sm:$0xff] %vm336, %v327
      %v345 = vld [vmem:[#allocation2 + $0x2] sm:$0xff]
      %v346 = vld [vmem:[#allocation2 + $0x12] sm:$0xff]
      %v347 = vld [vmem:[#allocation2 + $0x22] sm:$0xff]
      %v348 = vld [vmem:[#allocation2 + $0x32] sm:$0xff]
      %v349 = vld [vmem:[#allocation2 + $0x42] sm:$0xff]
      %v350 = vld [vmem:[#allocation2 + $0x52] sm:$0xff]
      %v351 = vld [vmem:[#allocation2 + $0x62] sm:$0xff]
      %v352 = vld [vmem:[#allocation2 + $0x72] sm:$0xff]
      %361 = vrot.lane.b32.xlu0 %v345, 8
      %v362 = vpop.permute.xlu0 %361
      %363 = vrot.lane.b32.xlu0 %v346, 8
      %v364 = vpop.permute.xlu0 %363
      %365 = vrot.lane.b32.xlu0 %v347, 8
      %v366 = vpop.permute.xlu0 %365
      %367 = vrot.lane.b32.xlu0 %v348, 8
      %v368 = vpop.permute.xlu0 %367
      %369 = vrot.lane.b32.xlu0 %v349, 8
      %v370 = vpop.permute.xlu0 %369
      %371 = vrot.lane.b32.xlu0 %v350, 8
      %v372 = vpop.permute.xlu0 %371
      %373 = vrot.lane.b32.xlu0 %v351, 8
      %v374 = vpop.permute.xlu0 %373
      %375 = vrot.lane.b32.xlu0 %v352, 8
      %v376 = vpop.permute.xlu0 %375
      %vm385 = vcmask 97344
      %386 = vst.msk [vmem:[#allocation3] sm:$0xff] %vm385, %v362
      %387 = vst.msk [vmem:[#allocation3 + $0x8] sm:$0xff] %vm385, %v364
      %388 = vst.msk [vmem:[#allocation3 + $0x10] sm:$0xff] %vm385, %v366
      %389 = vst.msk [vmem:[#allocation3 + $0x18] sm:$0xff] %vm385, %v368
      %390 = vst.msk [vmem:[#allocation3 + $0x20] sm:$0xff] %vm385, %v370
      %391 = vst.msk [vmem:[#allocation3 + $0x28] sm:$0xff] %vm385, %v372
      %392 = vst.msk [vmem:[#allocation3 + $0x30] sm:$0xff] %vm385, %v374
      %393 = vst.msk [vmem:[#allocation3 + $0x38] sm:$0xff] %vm385, %v376
      %v394 = vld [vmem:[%s271] sm:$0xff]
      %v395 = vld [vmem:[%s271 + $0x10] sm:$0xff]
      %v396 = vld [vmem:[%s271 + $0x20] sm:$0xff]
      %v397 = vld [vmem:[%s271 + $0x30] sm:$0xff]
      %v398 = vld [vmem:[%s271 + $0x40] sm:$0xff]
      %v399 = vld [vmem:[%s271 + $0x50] sm:$0xff]
      %v400 = vld [vmem:[%s271 + $0x60] sm:$0xff]
      %v401 = vld [vmem:[%s271 + $0x70] sm:$0xff]
      %410 = vrot.lane.b32.xlu0 %v394, 12
      %v411 = vpop.permute.xlu0 %410
      %412 = vrot.lane.b32.xlu0 %v395, 12
      %v413 = vpop.permute.xlu0 %412
      %414 = vrot.lane.b32.xlu0 %v396, 12
      %v415 = vpop.permute.xlu0 %414
      %416 = vrot.lane.b32.xlu0 %v397, 12
      %v417 = vpop.permute.xlu0 %416
      %418 = vrot.lane.b32.xlu0 %v398, 12
      %v419 = vpop.permute.xlu0 %418
      %420 = vrot.lane.b32.xlu0 %v399, 12
      %v421 = vpop.permute.xlu0 %420
      %422 = vrot.lane.b32.xlu0 %v400, 12
      %v423 = vpop.permute.xlu0 %422
      %424 = vrot.lane.b32.xlu0 %v401, 12
      %v425 = vpop.permute.xlu0 %424
      %vm434 = vcmask 130144
      %435 = vst.msk [vmem:[#allocation3] sm:$0xff] %vm434, %v411
      %436 = vst.msk [vmem:[#allocation3 + $0x8] sm:$0xff] %vm434, %v413
      %437 = vst.msk [vmem:[#allocation3 + $0x10] sm:$0xff] %vm434, %v415
      %438 = vst.msk [vmem:[#allocation3 + $0x18] sm:$0xff] %vm434, %v417
      %439 = vst.msk [vmem:[#allocation3 + $0x20] sm:$0xff] %vm434, %v419
      %440 = vst.msk [vmem:[#allocation3 + $0x28] sm:$0xff] %vm434, %v421
      %441 = vst.msk [vmem:[#allocation3 + $0x30] sm:$0xff] %vm434, %v423
      %442 = vst.msk [vmem:[#allocation3 + $0x38] sm:$0xff] %vm434, %v425
      %v443 = vld [vmem:[%s271 + $0x1] sm:$0xff]
      %v444 = vld [vmem:[%s271 + $0x11] sm:$0xff]
      %v445 = vld [vmem:[%s271 + $0x21] sm:$0xff]
      %v446 = vld [vmem:[%s271 + $0x31] sm:$0xff]
      %v447 = vld [vmem:[%s271 + $0x41] sm:$0xff]
      %v448 = vld [vmem:[%s271 + $0x51] sm:$0xff]
      %v449 = vld [vmem:[%s271 + $0x61] sm:$0xff]
      %v450 = vld [vmem:[%s271 + $0x71] sm:$0xff]
      %459 = vrot.lane.b32.xlu0 %v443, 16
      %v460 = vpop.permute.xlu0 %459
      %461 = vrot.lane.b32.xlu0 %v444, 16
      %v462 = vpop.permute.xlu0 %461
      %463 = vrot.lane.b32.xlu0 %v445, 16
      %v464 = vpop.permute.xlu0 %463
      %465 = vrot.lane.b32.xlu0 %v446, 16
      %v466 = vpop.permute.xlu0 %465
      %467 = vrot.lane.b32.xlu0 %v447, 16
      %v468 = vpop.permute.xlu0 %467
      %469 = vrot.lane.b32.xlu0 %v448, 16
      %v470 = vpop.permute.xlu0 %469
      %471 = vrot.lane.b32.xlu0 %v449, 16
      %v472 = vpop.permute.xlu0 %471
      %473 = vrot.lane.b32.xlu0 %v450, 16
      %v474 = vpop.permute.xlu0 %473
      %vm483 = vcmask 162944
      %484 = vst.msk [vmem:[#allocation3] sm:$0xff] %vm483, %v460
      %485 = vst.msk [vmem:[#allocation3 + $0x8] sm:$0xff] %vm483, %v462
      %486 = vst.msk [vmem:[#allocation3 + $0x10] sm:$0xff] %vm483, %v464
      %487 = vst.msk [vmem:[#allocation3 + $0x18] sm:$0xff] %vm483, %v466
      %488 = vst.msk [vmem:[#allocation3 + $0x20] sm:$0xff] %vm483, %v468
      %489 = vst.msk [vmem:[#allocation3 + $0x28] sm:$0xff] %vm483, %v470
      %490 = vst.msk [vmem:[#allocation3 + $0x30] sm:$0xff] %vm483, %v472
      %491 = vst.msk [vmem:[#allocation3 + $0x38] sm:$0xff] %vm483, %v474
      %v492 = vld [vmem:[%s271 + $0x2] sm:$0xff]
      %v493 = vld [vmem:[%s271 + $0x12] sm:$0xff]
      %v494 = vld [vmem:[%s271 + $0x22] sm:$0xff]
      %v495 = vld [vmem:[%s271 + $0x32] sm:$0xff]
      %v496 = vld [vmem:[%s271 + $0x42] sm:$0xff]
      %v497 = vld [vmem:[%s271 + $0x52] sm:$0xff]
      %v498 = vld [vmem:[%s271 + $0x62] sm:$0xff]
      %v499 = vld [vmem:[%s271 + $0x72] sm:$0xff]
      %508 = vrot.lane.b32.xlu0 %v492, 20
      %v509 = vpop.permute.xlu0 %508
      %510 = vrot.lane.b32.xlu0 %v493, 20
      %v511 = vpop.permute.xlu0 %510
      %512 = vrot.lane.b32.xlu0 %v494, 20
      %v513 = vpop.permute.xlu0 %512
      %514 = vrot.lane.b32.xlu0 %v495, 20
      %v515 = vpop.permute.xlu0 %514
      %516 = vrot.lane.b32.xlu0 %v496, 20
      %v517 = vpop.permute.xlu0 %516
      %518 = vrot.lane.b32.xlu0 %v497, 20
      %v519 = vpop.permute.xlu0 %518
      %520 = vrot.lane.b32.xlu0 %v498, 20
      %v521 = vpop.permute.xlu0 %520
      %522 = vrot.lane.b32.xlu0 %v499, 20
      %v523 = vpop.permute.xlu0 %522
      %vm532 = vcmask 195744
      %533 = vst.msk [vmem:[#allocation3] sm:$0xff] %vm532, %v509
      %534 = vst.msk [vmem:[#allocation3 + $0x8] sm:$0xff] %vm532, %v511
      %535 = vst.msk [vmem:[#allocation3 + $0x10] sm:$0xff] %vm532, %v513
      %536 = vst.msk [vmem:[#allocation3 + $0x18] sm:$0xff] %vm532, %v515
      %537 = vst.msk [vmem:[#allocation3 + $0x20] sm:$0xff] %vm532, %v517
      %538 = vst.msk [vmem:[#allocation3 + $0x28] sm:$0xff] %vm532, %v519
      %539 = vst.msk [vmem:[#allocation3 + $0x30] sm:$0xff] %vm532, %v521
      %540 = vst.msk [vmem:[#allocation3 + $0x38] sm:$0xff] %vm532, %v523
      %s541 = scalar_lea.vmem [#allocation2], 32
      %v542 = vld [vmem:[%s541] sm:$0xff]
      %v543 = vld [vmem:[%s541 + $0x10] sm:$0xff]
      %v544 = vld [vmem:[%s541 + $0x20] sm:$0xff]
      %v545 = vld [vmem:[%s541 + $0x30] sm:$0xff]
      %v546 = vld [vmem:[%s541 + $0x40] sm:$0xff]
      %v547 = vld [vmem:[%s541 + $0x50] sm:$0xff]
      %v548 = vld [vmem:[%s541 + $0x60] sm:$0xff]
      %v549 = vld [vmem:[%s541 + $0x70] sm:$0xff]
      %558 = vrot.lane.b32.xlu0 %v542, 24
      %v559 = vpop.permute.xlu0 %558
      %560 = vrot.lane.b32.xlu0 %v543, 24
      %v561 = vpop.permute.xlu0 %560
      %562 = vrot.lane.b32.xlu0 %v544, 24
      %v563 = vpop.permute.xlu0 %562
      %564 = vrot.lane.b32.xlu0 %v545, 24
      %v565 = vpop.permute.xlu0 %564
      %566 = vrot.lane.b32.xlu0 %v546, 24
      %v567 = vpop.permute.xlu0 %566
      %568 = vrot.lane.b32.xlu0 %v547, 24
      %v569 = vpop.permute.xlu0 %568
      %570 = vrot.lane.b32.xlu0 %v548, 24
      %v571 = vpop.permute.xlu0 %570
      %572 = vrot.lane.b32.xlu0 %v549, 24
      %v573 = vpop.permute.xlu0 %572
      %vm582 = vcmask 228544
      %583 = vst.msk [vmem:[#allocation3] sm:$0xff] %vm582, %v559
      %584 = vst.msk [vmem:[#allocation3 + $0x8] sm:$0xff] %vm582, %v561
      %585 = vst.msk [vmem:[#allocation3 + $0x10] sm:$0xff] %vm582, %v563
      %586 = vst.msk [vmem:[#allocation3 + $0x18] sm:$0xff] %vm582, %v565
      %587 = vst.msk [vmem:[#allocation3 + $0x20] sm:$0xff] %vm582, %v567
      %588 = vst.msk [vmem:[#allocation3 + $0x28] sm:$0xff] %vm582, %v569
      %589 = vst.msk [vmem:[#allocation3 + $0x30] sm:$0xff] %vm582, %v571
      %590 = vst.msk [vmem:[#allocation3 + $0x38] sm:$0xff] %vm582, %v573
      %v591 = vld [vmem:[%s541 + $0x1] sm:$0xff]
      %v592 = vld [vmem:[%s541 + $0x11] sm:$0xff]
      %v593 = vld [vmem:[%s541 + $0x21] sm:$0xff]
      %v594 = vld [vmem:[%s541 + $0x31] sm:$0xff]
      %v595 = vld [vmem:[%s541 + $0x41] sm:$0xff]
      %v596 = vld [vmem:[%s541 + $0x51] sm:$0xff]
      %v597 = vld [vmem:[%s541 + $0x61] sm:$0xff]
      %v598 = vld [vmem:[%s541 + $0x71] sm:$0xff]
      %607 = vrot.lane.b32.xlu0 %v591, 28
      %v608 = vpop.permute.xlu0 %607
      %609 = vrot.lane.b32.xlu0 %v592, 28
      %v610 = vpop.permute.xlu0 %609
      %611 = vrot.lane.b32.xlu0 %v593, 28
      %v612 = vpop.permute.xlu0 %611
      %613 = vrot.lane.b32.xlu0 %v594, 28
      %v614 = vpop.permute.xlu0 %613
      %615 = vrot.lane.b32.xlu0 %v595, 28
      %v616 = vpop.permute.xlu0 %615
      %617 = vrot.lane.b32.xlu0 %v596, 28
      %v618 = vpop.permute.xlu0 %617
      %619 = vrot.lane.b32.xlu0 %v597, 28
      %v620 = vpop.permute.xlu0 %619
      %621 = vrot.lane.b32.xlu0 %v598, 28
      %v622 = vpop.permute.xlu0 %621
      %vm631 = vcmask 261344
      %632 = vst.msk [vmem:[#allocation3] sm:$0xff] %vm631, %v608
      %633 = vst.msk [vmem:[#allocation3 + $0x8] sm:$0xff] %vm631, %v610
      %634 = vst.msk [vmem:[#allocation3 + $0x10] sm:$0xff] %vm631, %v612
      %635 = vst.msk [vmem:[#allocation3 + $0x18] sm:$0xff] %vm631, %v614
      %636 = vst.msk [vmem:[#allocation3 + $0x20] sm:$0xff] %vm631, %v616
      %637 = vst.msk [vmem:[#allocation3 + $0x28] sm:$0xff] %vm631, %v618
      %638 = vst.msk [vmem:[#allocation3 + $0x30] sm:$0xff] %vm631, %v620
      %639 = vst.msk [vmem:[#allocation3 + $0x38] sm:$0xff] %vm631, %v622
      %v640 = vld [vmem:[%s541 + $0x2] sm:$0xff]
      %v641 = vld [vmem:[%s541 + $0x12] sm:$0xff]
      %v642 = vld [vmem:[%s541 + $0x22] sm:$0xff]
      %v643 = vld [vmem:[%s541 + $0x32] sm:$0xff]
      %v644 = vld [vmem:[%s541 + $0x42] sm:$0xff]
      %v645 = vld [vmem:[%s541 + $0x52] sm:$0xff]
      %v646 = vld [vmem:[%s541 + $0x62] sm:$0xff]
      %v647 = vld [vmem:[%s541 + $0x72] sm:$0xff]
      %656 = vrot.lane.b32.xlu0 %v640, 32
      %v657 = vpop.permute.xlu0 %656
      %658 = vrot.lane.b32.xlu0 %v641, 32
      %v659 = vpop.permute.xlu0 %658
      %660 = vrot.lane.b32.xlu0 %v642, 32
      %v661 = vpop.permute.xlu0 %660
      %662 = vrot.lane.b32.xlu0 %v643, 32
      %v663 = vpop.permute.xlu0 %662
      %664 = vrot.lane.b32.xlu0 %v644, 32
      %v665 = vpop.permute.xlu0 %664
      %666 = vrot.lane.b32.xlu0 %v645, 32
      %v667 = vpop.permute.xlu0 %666
      %668 = vrot.lane.b32.xlu0 %v646, 32
      %v669 = vpop.permute.xlu0 %668
      %670 = vrot.lane.b32.xlu0 %v647, 32
      %v671 = vpop.permute.xlu0 %670
      %vm680 = vcmask 294144
      %681 = vst.msk [vmem:[#allocation3] sm:$0xff] %vm680, %v657
      %682 = vst.msk [vmem:[#allocation3 + $0x8] sm:$0xff] %vm680, %v659
      %683 = vst.msk [vmem:[#allocation3 + $0x10] sm:$0xff] %vm680, %v661
      %684 = vst.msk [vmem:[#allocation3 + $0x18] sm:$0xff] %vm680, %v663
      %685 = vst.msk [vmem:[#allocation3 + $0x20] sm:$0xff] %vm680, %v665
      %686 = vst.msk [vmem:[#allocation3 + $0x28] sm:$0xff] %vm680, %v667
      %687 = vst.msk [vmem:[#allocation3 + $0x30] sm:$0xff] %vm680, %v669
      %688 = vst.msk [vmem:[#allocation3 + $0x38] sm:$0xff] %vm680, %v671
      %v689 = vld [vmem:[#allocation3] sm:$0xff]
      %v690 = vld [vmem:[#allocation3 + $0x8] sm:$0xff]
      %v691 = vld [vmem:[#allocation3 + $0x10] sm:$0xff]
      %v692 = vld [vmem:[#allocation3 + $0x18] sm:$0xff]
      %v693 = vld [vmem:[#allocation3 + $0x20] sm:$0xff]
      %v694 = vld [vmem:[#allocation3 + $0x28] sm:$0xff]
      %v695 = vld [vmem:[#allocation3 + $0x30] sm:$0xff]
      %v696 = vld [vmem:[#allocation3 + $0x38] sm:$0xff]
      %v697 = vld [vmem:[%s1] sm:$0xff]
      %v698 = vld [vmem:[%s1 + $0x8] sm:$0xff]
      %v699 = vld [vmem:[%s1 + $0x10] sm:$0xff]
      %v700 = vld [vmem:[%s1 + $0x18] sm:$0xff]
      %v701 = vld [vmem:[%s1 + $0x20] sm:$0xf]
      %v702 = vld [vmem:[%s2] sm:$0x1]
      %v704 = vperm.slane %v702, 0
      %vm706 = vcmask 293888
      %v708 = vsel %vm706, %v689, 0
      %v711 = vsel %vm706, %v690, 0
      %v714 = vsel %vm706, %v691, 0
      %v717 = vsel %vm706, %v692, 0
      %v720 = vsel %vm706, %v693, 0
      %v723 = vsel %vm706, %v694, 0
      %v726 = vsel %vm706, %v695, 0
      %v729 = vsel %vm706, %v696, 0
      %vm731 = vcmask 1043456
      %v733 = vsel %vm731, %v701, 0
      %735 = vmatpush.msra.mxu0 0.0
      %736 = vmatpush.msra.mxu0 0.0
      %737 = vmatpush.msra.mxu0 0.0
      %738 = vmatpush.msra.mxu0 0.0
      %739 = vmatpush.msra.mxu0 0.0
      %740 = vmatpush.msra.mxu0 0.0
      %741 = vmatpush.msra.mxu0 0.0
      %742 = vmatpush.msra.mxu0 0.0
      %743 = vmatpush.msra.mxu0 0.0
      %744 = vmatpush.msra.mxu0 0.0
      %745 = vmatpush.msra.mxu0 0.0
      %746 = vmatpush.msra.mxu0 %v733
      %747 = vmatpush.msra.mxu0 %v700
      %748 = vmatpush.msra.mxu0 %v699
      %749 = vmatpush.msra.mxu0 %v698
      %750 = vmatpush.msra.mxu0 %v697
      %751 = vmatmul.f32.gmra.mxu0 %v708
      %v752 = vpop.f32.mrf.mxu0
      %v753 = vadd.f32 %v704, %v752
      %754 = vmatmul.f32.gmra.mxu0 %v711
      %v755 = vpop.f32.mrf.mxu0
      %v756 = vadd.f32 %v704, %v755
      %757 = vmatmul.f32.gmra.mxu0 %v714
      %v758 = vpop.f32.mrf.mxu0
      %v759 = vadd.f32 %v704, %v758
      %760 = vmatmul.f32.gmra.mxu0 %v717
      %v761 = vpop.f32.mrf.mxu0
      %v762 = vadd.f32 %v704, %v761
      %763 = vmatmul.f32.gmra.mxu0 %v720
      %v764 = vpop.f32.mrf.mxu0
      %v765 = vadd.f32 %v704, %v764
      %766 = vmatmul.f32.gmra.mxu0 %v723
      %v767 = vpop.f32.mrf.mxu0
      %v768 = vadd.f32 %v704, %v767
      %769 = vmatmul.f32.gmra.mxu0 %v726
      %v770 = vpop.f32.mrf.mxu0
      %v771 = vadd.f32 %v704, %v770
      %772 = vmatmul.f32.gmra.mxu0 %v729
      %v773 = vpop.f32.mrf.mxu0
      %v774 = vadd.f32 %v704, %v773
      %775 = vdwg.mxu0
      %vm776 = vcmask 64512
      %777 = vst.msk [vmem:[%s170] sm:$0xff] %vm776, %v753
      %778 = vst.msk [vmem:[%s170 + $0x8] sm:$0xff] %vm776, %v756
      %779 = vst.msk [vmem:[%s170 + $0x10] sm:$0xff] %vm776, %v759
      %780 = vst.msk [vmem:[%s170 + $0x18] sm:$0xff] %vm776, %v762
      %781 = vst.msk [vmem:[%s170 + $0x20] sm:$0xff] %vm776, %v765
      %782 = vst.msk [vmem:[%s170 + $0x28] sm:$0xff] %vm776, %v768
      %783 = vst.msk [vmem:[%s170 + $0x30] sm:$0xff] %vm776, %v771
      %784 = vst.msk [vmem:[%s170 + $0x38] sm:$0xff] %vm776, %v774
      %p785 = scmp.lt.s32.totalorder %s14, 1
      %s786 = scalar_select %p785, %s14, 1
      %s787 = smul.addr %s786, 8
      %s788 = smul.addr %s787, 8
      %s789 = scalar_lea.vmem %s3, %s788
      // Predicated region
      $region33: #{downsample_conv2d.1} parent=31 // pred_check
        %p790 = pneg %p100
      $region34: #{downsample_conv2d.1} parent=31 // pred_check_branch
        %792 = sbr.rel (%p790) target = $region36
      $region35: #{downsample_conv2d.1} parent=31 // pred_region
        _
      $region36: #{downsample_conv2d.1} parent=31 // pred_fallthru
        _
    $region32: #{downsample_conv2d.1} parent=5 // pred_fallthru
      _
    %p793 = scmp.le.s32.totalorder 2, %s9
    // Predicated region
    $region37: #{downsample_conv2d.1} parent=5 // pred_check
      %p794 = pneg %p793
    $region38: #{downsample_conv2d.1} parent=5 // pred_check_branch
      %796 = sbr.rel (%p794) target = $region40
    $region39: #{downsample_conv2d.1} parent=5 // pred_region
      %s797 = ssub.s32 %s9, 2
      // Predicated region
      $region41: #{downsample_conv2d.1} parent=39 // pred_check
        %p798 = pneg %p106
      $region42: #{downsample_conv2d.1} parent=39 // pred_check_branch
        %800 = sbr.rel (%p798) target = $region44
      $region43: #{downsample_conv2d.1} parent=39 // pred_region
        %p801 = scmp.lt.s32.totalorder %s15, 1
        %s802 = scalar_select %p801, %s15, 1
        %s803 = smul.addr %s802, 8
        %s804 = smul.addr %s803, 8
        %s805 = scalar_lea.vmem %s3, %s804
      $region44: #{downsample_conv2d.1} parent=39 // pred_fallthru
        _
    $region40: #{downsample_conv2d.1} parent=5 // pred_fallthru
      _
  $region6: #{downsample_conv2d.1} parent=0 // loop_footer
    %s13 = sadd.s32 1, %s9
  $region7: #{downsample_conv2d.1} parent=0 // loop_footer_branch
    %8 = sbr.rel target = $region3
  $region8: #{downsample_conv2d.1} parent=0 // loop_exit
    _

</llo_original>
